<compile_context>
chip_gen: v6e
topology: v6e:2x2x1
jax: 0.10.0
libtpu: 0.0.40
codegen_flags: <defaults>
</compile_context>

<pallas_src>
import functools

import jax
import jax.numpy as jnp
from jax.experimental import pallas as pl
from jax.experimental.pallas import tpu as pltpu


def _generator_kernel(x_ref, w1_ref, b1_ref, w2_ref, b2_ref, out_ref):
    # MXU operands in bf16 (cast in-kernel from the f32 refs); accumulation
    # and all elementwise math (bias, LeakyReLU, tanh) stay in f32.
    x = x_ref[...].astype(jnp.bfloat16)
    w1 = w1_ref[...].astype(jnp.bfloat16)
    h = jnp.dot(x, w1, preferred_element_type=jnp.float32)
    h = h + b1_ref[...]                         # (TM, 256) + (1, 256), f32
    h = jnp.where(h >= 0.0, h, 0.1 * h)         # LeakyReLU(0.1), f32

    w2 = w2_ref[...].astype(jnp.bfloat16)
    o = jnp.dot(h.astype(jnp.bfloat16), w2, preferred_element_type=jnp.float32)
    o = o + b2_ref[...]                         # (TM, img_dim) + (1, img_dim)
    out_ref[...] = jnp.tanh(o).astype(out_ref.dtype)   # tanh on EUP, f32


def _round_up(n, m):
    return ((n + m - 1) // m) * m


@functools.partial(jax.jit, static_argnames=("tm", "out_dtype"))
def generator_forward(x, w1, b1, w2, b2, *, tm=1024, out_dtype=jnp.float32):
    """Generator MLP forward pass as a single batch-tiled Pallas kernel.

    x  : (B, z_dim)      float32
    w1 : (z_dim, 256)    float32   (transposed vs. PyTorch nn.Linear.weight)
    b1 : (256,) or (1, 256)        float32
    w2 : (256, img_dim)  float32   (transposed vs. PyTorch nn.Linear.weight)
    b2 : (img_dim,) or (1, img_dim) float32
    returns (B, img_dim) in `out_dtype` (float32 default; bf16 optional to
    halve the dominant HBM write stream).
    """
    B, z_dim = x.shape
    hidden, img_dim = w2.shape
    b1 = b1.reshape(1, hidden)
    b2 = b2.reshape(1, img_dim)

    # Batch tile: large (amortize per-step overhead, deepen MXU pipelining on
    # the second matmul), multiple of 8 (f32 sublane), capped at ceil(B/2) so
    # the grid has >= 2 steps (v7x megacore) and divides common batch sizes.
    tm_eff = max(8, min(tm, _round_up((B + 1) // 2, 8)))
    b_pad = _round_up(B, tm_eff)
    if b_pad != B:
        x = jnp.pad(x, ((0, b_pad - B), (0, 0)))

    grid = (b_pad // tm_eff,)

    out_itemsize = jnp.dtype(out_dtype).itemsize
    flops = 2 * b_pad * (z_dim * hidden + hidden * img_dim)
    bytes_accessed = (
        x.size * 4 + w1.size * 4 + b1.size * 4 + w2.size * 4 + b2.size * 4
        + b_pad * img_dim * out_itemsize
    )

    out = pl.pallas_call(
        _generator_kernel,
        out_shape=jax.ShapeDtypeStruct((b_pad, img_dim), out_dtype),
        grid_spec=pltpu.PrefetchScalarGridSpec(
            num_scalar_prefetch=0,
            grid=grid,
            in_specs=[
                pl.BlockSpec((tm_eff, z_dim), lambda i: (i, 0)),    # x tile
                pl.BlockSpec((z_dim, hidden), lambda i: (0, 0)),    # W1 resident
                pl.BlockSpec((1, hidden), lambda i: (0, 0)),        # b1 resident
                pl.BlockSpec((hidden, img_dim), lambda i: (0, 0)),  # W2 resident
                pl.BlockSpec((1, img_dim), lambda i: (0, 0)),       # b2 resident
            ],
            # Last dim 784 == full array dim -> legal block; no lane padding.
            out_specs=pl.BlockSpec((tm_eff, img_dim), lambda i: (i, 0)),
        ),
        compiler_params=pltpu.CompilerParams(
            # Batch tiles are independent -> megacore-shardable on v7x.
            dimension_semantics=("parallel",),
            vmem_limit_bytes=32 * 1024 * 1024,
        ),
        cost_estimate=pl.CostEstimate(
            flops=flops,
            transcendentals=b_pad * img_dim,
            bytes_accessed=bytes_accessed,
        ),
    )(x, w1, b1, w2, b2)

    # No feature-dim slice anymore; row slice only if the batch was padded.
    return out if b_pad == B else out[:B]


def init_generator_params(key, z_dim, hidden, img_dim):
    """PyTorch-style nn.Linear init: U(-1/sqrt(fan_in), 1/sqrt(fan_in)).

    Weights are returned already transposed to (in_features, out_features).
    """
    k1, k2, k3, k4 = jax.random.split(key, 4)
    bound1 = 1.0 / jnp.sqrt(z_dim)
    bound2 = 1.0 / jnp.sqrt(hidden)
    w1 = jax.random.uniform(k1, (z_dim, hidden), jnp.float32, -bound1, bound1)
    b1 = jax.random.uniform(k2, (hidden,), jnp.float32, -bound1, bound1)
    w2 = jax.random.uniform(k3, (hidden, img_dim), jnp.float32, -bound2, bound2)
    b2 = jax.random.uniform(k4, (img_dim,), jnp.float32, -bound2, bound2)
    return w1, b1, w2, b2


if __name__ == "__main__":
    z_dim = 64
    hidden = 256
    img_dim = 784   # 28x28 MNIST image, flattened
    batch = 32      # small; tile cap ceil(B/2)=16 -> grid=(2,) with no padding

    key = jax.random.PRNGKey(0)
    k_params, k_x = jax.random.split(key)

    w1, b1, w2, b2 = init_generator_params(k_params, z_dim, hidden, img_dim)
    x = jax.random.normal(k_x, (batch, z_dim), dtype=jnp.float32)

    out = generator_forward(x, w1, b1, w2, b2)
    out = jax.block_until_ready(out)
    assert out.shape == (batch, img_dim)
    assert out.dtype == jnp.float32

    # Reference 1: same bf16-operand / f32-accumulate math in plain JAX.
    b1r = b1.reshape(1, -1)
    b2r = b2.reshape(1, -1)
    h_bf = jnp.dot(x.astype(jnp.bfloat16), w1.astype(jnp.bfloat16),
                   preferred_element_type=jnp.float32) + b1r
    h_bf = jnp.where(h_bf >= 0.0, h_bf, 0.1 * h_bf)
    ref_bf = jnp.tanh(jnp.dot(h_bf.astype(jnp.bfloat16), w2.astype(jnp.bfloat16),
                              preferred_element_type=jnp.float32) + b2r)
    assert jnp.allclose(out, ref_bf, atol=2e-3, rtol=2e-3)

    # Reference 2: full-f32 PyTorch-equivalent forward (loose tolerance due to
    # the bf16 MXU operands).
    h_f32 = x @ w1 + b1r
    h_f32 = jnp.where(h_f32 >= 0.0, h_f32, 0.1 * h_f32)
    ref_f32 = jnp.tanh(h_f32 @ w2 + b2r)
    assert jnp.allclose(out, ref_f32, atol=3e-2, rtol=3e-2)

    # Optional bf16-output path (halves the dominant HBM write stream).
    out_bf16 = generator_forward(x, w1, b1, w2, b2, out_dtype=jnp.bfloat16)
    out_bf16 = jax.block_until_ready(out_bf16)
    assert out_bf16.dtype == jnp.bfloat16
    assert jnp.allclose(out_bf16.astype(jnp.float32), ref_f32,
                        atol=5e-2, rtol=5e-2)

    print("KERNEL_OK")
</pallas_src>

<mosaic_0001>
module attributes {stable_mosaic.version = 11 : i64} {
  func.func @_generator_kernel(%arg0: i32, %arg1: memref<16x64xf32, #tpu.memory_space<vmem>>, %arg2: memref<64x256xf32, #tpu.memory_space<vmem>>, %arg3: memref<1x256xf32, #tpu.memory_space<vmem>>, %arg4: memref<256x784xf32, #tpu.memory_space<vmem>>, %arg5: memref<1x784xf32, #tpu.memory_space<vmem>>, %arg6: memref<16x784xf32, #tpu.memory_space<vmem>>) attributes {dimension_semantics = [#tpu.dimension_semantics<parallel>], iteration_bounds = array<i64: 2>, scalar_prefetch = 0 : i64, scratch_operands = 0 : i64, tpu.core_type = #tpu.core_type<tc>, window_params = [{transform_indices = @transform_0, window_bounds = array<i64: 16, 64>}, {pipeline_mode = #tpu.pipeline_mode<synchronous>, transform_indices = @transform_1, window_bounds = array<i64: 64, 256>}, {pipeline_mode = #tpu.pipeline_mode<synchronous>, transform_indices = @transform_2, window_bounds = array<i64: 1, 256>}, {pipeline_mode = #tpu.pipeline_mode<synchronous>, transform_indices = @transform_3, window_bounds = array<i64: 256, 784>}, {pipeline_mode = #tpu.pipeline_mode<synchronous>, transform_indices = @transform_4, window_bounds = array<i64: 1, 784>}, {transform_indices = @transform_5, window_bounds = array<i64: 16, 784>}]} {
    %c0 = arith.constant 0 : index
    %c0_0 = arith.constant 0 : index
    %0 = vector.load %arg1[%c0, %c0_0] : memref<16x64xf32, #tpu.memory_space<vmem>>, vector<16x64xf32>
    %1 = arith.truncf %0 : vector<16x64xf32> to vector<16x64xbf16>
    %c0_1 = arith.constant 0 : index
    %c0_2 = arith.constant 0 : index
    %2 = vector.load %arg2[%c0_1, %c0_2] : memref<64x256xf32, #tpu.memory_space<vmem>>, vector<64x256xf32>
    %3 = arith.truncf %2 : vector<64x256xf32> to vector<64x256xbf16>
    %cst = arith.constant dense<0.000000e+00> : vector<16x256xf32>
    %4 = tpu.matmul %1, %3, %cst {dimension_numbers = #tpu.dot_dimension_numbers<[1], [0], [0], [1], [0, 0, 1, 1], [], []>} : vector<16x64xbf16>, vector<64x256xbf16>, vector<16x256xf32> -> vector<16x256xf32>
    %c0_3 = arith.constant 0 : index
    %c0_4 = arith.constant 0 : index
    %5 = vector.load %arg3[%c0_3, %c0_4] : memref<1x256xf32, #tpu.memory_space<vmem>>, vector<1x256xf32>
    %6 = vector.broadcast %5 : vector<1x256xf32> to vector<16x256xf32>
    %7 = arith.addf %4, %6 : vector<16x256xf32>
    %cst_5 = arith.constant 0.000000e+00 : f32
    %8 = vector.broadcast %cst_5 : f32 to vector<16x256xf32>
    %9 = arith.cmpf oge, %7, %8 : vector<16x256xf32>
    %cst_6 = arith.constant 1.000000e-01 : f32
    %10 = vector.broadcast %cst_6 : f32 to vector<16x256xf32>
    %11 = arith.mulf %10, %7 : vector<16x256xf32>
    %12 = arith.select %9, %7, %11 : vector<16x256xi1>, vector<16x256xf32>
    %c0_7 = arith.constant 0 : index
    %c0_8 = arith.constant 0 : index
    %13 = vector.load %arg4[%c0_7, %c0_8] : memref<256x784xf32, #tpu.memory_space<vmem>>, vector<256x784xf32>
    %14 = arith.truncf %13 : vector<256x784xf32> to vector<256x784xbf16>
    %15 = arith.truncf %12 : vector<16x256xf32> to vector<16x256xbf16>
    %cst_9 = arith.constant dense<0.000000e+00> : vector<16x784xf32>
    %16 = tpu.matmul %15, %14, %cst_9 {dimension_numbers = #tpu.dot_dimension_numbers<[1], [0], [0], [1], [0, 0, 1, 1], [], []>} : vector<16x256xbf16>, vector<256x784xbf16>, vector<16x784xf32> -> vector<16x784xf32>
    %c0_10 = arith.constant 0 : index
    %c0_11 = arith.constant 0 : index
    %17 = vector.load %arg5[%c0_10, %c0_11] : memref<1x784xf32, #tpu.memory_space<vmem>>, vector<1x784xf32>
    %18 = vector.broadcast %17 : vector<1x784xf32> to vector<16x784xf32>
    %19 = arith.addf %16, %18 : vector<16x784xf32>
    %20 = math.tanh %19 : vector<16x784xf32>
    %c0_12 = arith.constant 0 : index
    %c0_13 = arith.constant 0 : index
    %21 = vector.load %arg6[%c0_12, %c0_13] : memref<16x784xf32, #tpu.memory_space<vmem>>, vector<16x784xf32>
    tpu.vector_store %arg6[%c0_12, %c0_13], %20 {strides = array<i32>} : memref<16x784xf32, #tpu.memory_space<vmem>>, vector<16x784xf32>,
    return
  }
  func.func @transform_0(%arg0: i32) -> (i32, i32) {
    %c0_i32 = arith.constant 0 : i32
    %c0_i32_0 = arith.constant 0 : i32
    return %arg0, %c0_i32 : i32, i32
  }
  func.func @transform_1(%arg0: i32) -> (i32, i32) {
    %c0_i32 = arith.constant 0 : i32
    %c0_i32_0 = arith.constant 0 : i32
    %c0_i32_1 = arith.constant 0 : i32
    return %c0_i32, %c0_i32_0 : i32, i32
  }
  func.func @transform_2(%arg0: i32) -> (i32, i32) {
    %c0_i32 = arith.constant 0 : i32
    %c0_i32_0 = arith.constant 0 : i32
    %c0_i32_1 = arith.constant 0 : i32
    return %c0_i32, %c0_i32_0 : i32, i32
  }
  func.func @transform_3(%arg0: i32) -> (i32, i32) {
    %c0_i32 = arith.constant 0 : i32
    %c0_i32_0 = arith.constant 0 : i32
    %c0_i32_1 = arith.constant 0 : i32
    return %c0_i32, %c0_i32_0 : i32, i32
  }
  func.func @transform_4(%arg0: i32) -> (i32, i32) {
    %c0_i32 = arith.constant 0 : i32
    %c0_i32_0 = arith.constant 0 : i32
    %c0_i32_1 = arith.constant 0 : i32
    return %c0_i32, %c0_i32_0 : i32, i32
  }
  func.func @transform_5(%arg0: i32) -> (i32, i32) {
    %c0_i32 = arith.constant 0 : i32
    %c0_i32_0 = arith.constant 0 : i32
    return %arg0, %c0_i32 : i32, i32
  }
}

</mosaic_0001>

<llo_original>
// kernel: generator_forward.1
$region0: #{generator_forward.1}
  #allocation0 [shape = 'u32[]', space=smem, size = 0x4, offset = 0x4, fixed_abs, tag = 'smem constant byte address 0x4 - core index']
  #allocation1 [shape = 'u32[144,128]{1,0:T(1,128)}', space=vmem, size = 0x12000, scoped, tag = 'internal scratch']
  %s0 = inlined_call_operand.vmem [shape: f32[32,64], index: 0, kind: input, shape index: {}]
  %s1 = inlined_call_operand.vmem [shape: f32[64,256], index: 1, kind: input, shape index: {}]
  %s2 = inlined_call_operand.vmem [shape: f32[1,256], index: 2, kind: input, shape index: {}]
  %s3 = inlined_call_operand.vmem [shape: f32[256,784], index: 3, kind: input, shape index: {}]
  %s4 = inlined_call_operand.vmem [shape: f32[1,784], index: 4, kind: input, shape index: {}]
  %s5 = inlined_call_operand.hbm [shape: f32[32,784], index: 5, kind: output, shape index: {}]
  %s6 = sld [smem:[#allocation0]]
  $region53: #{generator_forward.1} parent=0
    _
  %s8 = ssub.s32 1, %s6
  %s9 = scalar_select 0, %s8, %s6
  $region1: #{generator_forward.1} parent=0
    #allocation2 [shape = 'u8[114688]{0}', space=vmem, size = 0x1c000, scoped, tag = 'output window, operand 0']
    #allocation3 [shape = 's32[2]{0}', space=sflag, size = 0x8, scoped, tag = 'scoped memory for generator_forward.1']
    %10 = vsyncpa [#allocation3], 0
    %s11 = scalar_lea.sflag [#allocation3], 1
    %12 = vsyncpa %s11, 0
    loop: start=0, step=1, limit=4
    $region2: #{generator_forward.1} parent=1 // loop_pre_header
      _
    $region3: #{generator_forward.1} parent=1 // loop_header
      %s14 = sphi 0, %s18
      %p15 = scmp.ge.s32.totalorder %s14, 4
      %s24 = sphi 0, %s26
      %s27 = sphi 0, %s24
      %s28 = sphi 0, %s27
      %s44 = sphi 0, %s28
      %s48 = sphi 0, %s48
      %s50 = sphi 0, %s48
      %s51 = sphi 0, %s50
      %s65 = sphi 0, %s51
      %s69 = sphi 0, %s69
      %s71 = sphi 0, %s69
      %s72 = sphi 0, %s71
      %s86 = sphi 0, %s72
      %s90 = sphi 0, %s90
      %s92 = sphi 0, %s90
      %s93 = sphi 0, %s92
      %s107 = sphi 0, %s93
      %s111 = sphi 0, %s111
      %s113 = sphi 0, %s111
      %s114 = sphi 0, %s113
      %s128 = sphi 0, %s114
      %s134 = sphi 0, %s136
      %s137 = sphi 0, %s134
      %s138 = sphi 0, %s137
      %s154 = sphi 0, %s138
    $region4: #{generator_forward.1} parent=1 // loop_header_branch
      %17 = sbr.rel (%p15) target = $region8
    $region5: #{generator_forward.1} parent=1 // loop_body
      %s19 = ssub.s32 %s14, 1
      %s20 = ssub.s32 %s14, 2
      %s21 = sadd.s32 %s14, 1
      %s22 = ssub.s32 %s14, %s21
      %p23 = scmp.eq.s32.totalorder %s22, 0
      %s25 = sadd.s32 %s24, 1
      %s26 = scalar_select %p23, %s24, %s25
      %p29 = pneg %p23
      %p30 = scmp.eq.s32.totalorder %s14, 1
      %p31 = por %p29, %p30
      %p32 = scmp.ne.s32.totalorder %s24, %s27
      %p33 = scmp.eq.s32.totalorder %s14, 0
      %p34 = por %p32, %p33
      %p35 = scmp.ne.s32.totalorder %s24, %s27
      %p36 = scmp.eq.s32.totalorder %s19, 1
      %p37 = por %p35, %p36
      %p38 = scmp.ne.s32.totalorder %s27, %s28
      %p39 = scmp.eq.s32.totalorder %s19, 0
      %p40 = por %p38, %p39
      %p41 = scmp.ne.s32.totalorder %s27, %s28
      %p42 = scmp.eq.s32.totalorder %s20, 1
      %p43 = por %p41, %p42
      %p45 = scmp.ne.s32.totalorder %s28, %s44
      %p46 = scmp.eq.s32.totalorder %s20, 0
      %p47 = por %p45, %p46
      %s49 = sadd.s32 %s48, 1
      %p52 = scmp.eq.s32.totalorder %s14, 1
      %p53 = scmp.ne.s32.totalorder %s48, %s50
      %p54 = scmp.eq.s32.totalorder %s14, 0
      %p55 = por %p53, %p54
      %p56 = scmp.ne.s32.totalorder %s48, %s50
      %p57 = scmp.eq.s32.totalorder %s19, 1
      %p58 = por %p56, %p57
      %p59 = scmp.ne.s32.totalorder %s50, %s51
      %p60 = scmp.eq.s32.totalorder %s19, 0
      %p61 = por %p59, %p60
      %p62 = scmp.ne.s32.totalorder %s50, %s51
      %p63 = scmp.eq.s32.totalorder %s20, 1
      %p64 = por %p62, %p63
      %p66 = scmp.ne.s32.totalorder %s51, %s65
      %p67 = scmp.eq.s32.totalorder %s20, 0
      %p68 = por %p66, %p67
      %s70 = sadd.s32 %s69, 1
      %p73 = scmp.eq.s32.totalorder %s14, 1
      %p74 = scmp.ne.s32.totalorder %s69, %s71
      %p75 = scmp.eq.s32.totalorder %s14, 0
      %p76 = por %p74, %p75
      %p77 = scmp.ne.s32.totalorder %s69, %s71
      %p78 = scmp.eq.s32.totalorder %s19, 1
      %p79 = por %p77, %p78
      %p80 = scmp.ne.s32.totalorder %s71, %s72
      %p81 = scmp.eq.s32.totalorder %s19, 0
      %p82 = por %p80, %p81
      %p83 = scmp.ne.s32.totalorder %s71, %s72
      %p84 = scmp.eq.s32.totalorder %s20, 1
      %p85 = por %p83, %p84
      %p87 = scmp.ne.s32.totalorder %s72, %s86
      %p88 = scmp.eq.s32.totalorder %s20, 0
      %p89 = por %p87, %p88
      %s91 = sadd.s32 %s90, 1
      %p94 = scmp.eq.s32.totalorder %s14, 1
      %p95 = scmp.ne.s32.totalorder %s90, %s92
      %p96 = scmp.eq.s32.totalorder %s14, 0
      %p97 = por %p95, %p96
      %p98 = scmp.ne.s32.totalorder %s90, %s92
      %p99 = scmp.eq.s32.totalorder %s19, 1
      %p100 = por %p98, %p99
      %p101 = scmp.ne.s32.totalorder %s92, %s93
      %p102 = scmp.eq.s32.totalorder %s19, 0
      %p103 = por %p101, %p102
      %p104 = scmp.ne.s32.totalorder %s92, %s93
      %p105 = scmp.eq.s32.totalorder %s20, 1
      %p106 = por %p104, %p105
      %p108 = scmp.ne.s32.totalorder %s93, %s107
      %p109 = scmp.eq.s32.totalorder %s20, 0
      %p110 = por %p108, %p109
      %s112 = sadd.s32 %s111, 1
      %p115 = scmp.eq.s32.totalorder %s14, 1
      %p116 = scmp.ne.s32.totalorder %s111, %s113
      %p117 = scmp.eq.s32.totalorder %s14, 0
      %p118 = por %p116, %p117
      %p119 = scmp.ne.s32.totalorder %s111, %s113
      %p120 = scmp.eq.s32.totalorder %s19, 1
      %p121 = por %p119, %p120
      %p122 = scmp.ne.s32.totalorder %s113, %s114
      %p123 = scmp.eq.s32.totalorder %s19, 0
      %p124 = por %p122, %p123
      %p125 = scmp.ne.s32.totalorder %s113, %s114
      %p126 = scmp.eq.s32.totalorder %s20, 1
      %p127 = por %p125, %p126
      %p129 = scmp.ne.s32.totalorder %s114, %s128
      %p130 = scmp.eq.s32.totalorder %s20, 0
      %p131 = por %p129, %p130
      %s132 = ssub.s32 %s14, %s21
      %p133 = scmp.eq.s32.totalorder %s132, 0
      %s135 = sadd.s32 %s134, 1
      %s136 = scalar_select %p133, %s134, %s135
      %p139 = pneg %p133
      %p140 = scmp.eq.s32.totalorder %s14, 1
      %p141 = por %p139, %p140
      %p142 = scmp.ne.s32.totalorder %s134, %s137
      %p143 = scmp.eq.s32.totalorder %s14, 0
      %p144 = por %p142, %p143
      %p145 = scmp.ne.s32.totalorder %s134, %s137
      %p146 = scmp.eq.s32.totalorder %s19, 1
      %p147 = por %p145, %p146
      %p148 = scmp.ne.s32.totalorder %s137, %s138
      %p149 = scmp.eq.s32.totalorder %s19, 0
      %p150 = por %p148, %p149
      %p151 = scmp.ne.s32.totalorder %s137, %s138
      %p152 = scmp.eq.s32.totalorder %s20, 1
      %p153 = por %p151, %p152
      %p155 = scmp.ne.s32.totalorder %s138, %s154
      %p156 = scmp.eq.s32.totalorder %s20, 0
      %p157 = por %p155, %p156
      %p158 = scmp.le.s32.totalorder 1, %s14
      %p159 = scmp.lt.s32.totalorder %s14, 3
      %p160 = pnand %p158, %p159
      %p161 = pneg %p160
      // Predicated region
      $region9: #{generator_forward.1} parent=5 // pred_check
        _
      $region10: #{generator_forward.1} parent=5 // pred_check_branch
        %163 = sbr.rel (%p160) target = $region12
      $region11: #{generator_forward.1} parent=5 // pred_region
        %s164 = ssub.s32 %s14, 1
        // Predicated region
        $region13: #{generator_forward.1} parent=11 // pred_check
          %p165 = pneg %p61
        $region14: #{generator_forward.1} parent=11 // pred_check_branch
          %167 = sbr.rel (%p165) target = $region16
        $region15: #{generator_forward.1} parent=11 // pred_region
          _
        $region16: #{generator_forward.1} parent=11 // pred_fallthru
          _
        // Predicated region
        $region17: #{generator_forward.1} parent=11 // pred_check
          %p168 = pneg %p82
        $region18: #{generator_forward.1} parent=11 // pred_check_branch
          %170 = sbr.rel (%p168) target = $region20
        $region19: #{generator_forward.1} parent=11 // pred_region
          _
        $region20: #{generator_forward.1} parent=11 // pred_fallthru
          _
        // Predicated region
        $region21: #{generator_forward.1} parent=11 // pred_check
          %p171 = pneg %p103
        $region22: #{generator_forward.1} parent=11 // pred_check_branch
          %173 = sbr.rel (%p171) target = $region24
        $region23: #{generator_forward.1} parent=11 // pred_region
          _
        $region24: #{generator_forward.1} parent=11 // pred_fallthru
          _
        // Predicated region
        $region25: #{generator_forward.1} parent=11 // pred_check
          %p174 = pneg %p124
        $region26: #{generator_forward.1} parent=11 // pred_check_branch
          %176 = sbr.rel (%p174) target = $region28
        $region27: #{generator_forward.1} parent=11 // pred_region
          _
        $region28: #{generator_forward.1} parent=11 // pred_fallthru
          _
      $region12: #{generator_forward.1} parent=5 // pred_fallthru
        _
      %p177 = scmp.lt.s32.totalorder %s14, 2
      // Predicated region
      $region29: #{generator_forward.1} parent=5 // pred_check
        %p178 = pneg %p177
      $region30: #{generator_forward.1} parent=5 // pred_check_branch
        %180 = sbr.rel (%p178) target = $region32
      $region31: #{generator_forward.1} parent=5 // pred_region
        // Predicated region
        $region33: #{generator_forward.1} parent=31 // pred_check
          %p181 = pneg %p34
        $region34: #{generator_forward.1} parent=31 // pred_check_branch
          %183 = sbr.rel (%p181) target = $region36
        $region35: #{generator_forward.1} parent=31 // pred_region
          %s184 = smul.u32 2, %s14
          %p185 = scmp.lt.s32.totalorder %s184, 3
          %s186 = scalar_select %p185, %s184, 3
          %s187 = smul.addr %s186, 8
          %s188 = scalar_lea.vmem %s0, %s187
          %s189 = smul.u32 2, %s14
        $region36: #{generator_forward.1} parent=31 // pred_fallthru
          _
      $region32: #{generator_forward.1} parent=5 // pred_fallthru
        _
      %p190 = scmp.le.s32.totalorder 1, %s14
      %p191 = scmp.lt.s32.totalorder %s14, 3
      %p192 = pnand %p190, %p191
      %p193 = pneg %p192
      // Predicated region
      $region37: #{generator_forward.1} parent=5 // pred_check
        _
      $region38: #{generator_forward.1} parent=5 // pred_check_branch
        %195 = sbr.rel (%p192) target = $region40
      $region39: #{generator_forward.1} parent=5 // pred_region
        %s196 = ssub.s32 %s14, 1
        %s197 = smul.u32 2, %s19
        %p198 = scmp.lt.s32.totalorder %s197, 3
        %s199 = scalar_select %p198, %s197, 3
        %s200 = smul.addr %s199, 8
        %s201 = scalar_lea.vmem %s0, %s200
        %p202 = pneg %p40
        %p203 = pneg %p37
        %p204 = pneg %p61
        %p205 = pneg %p58
        %p206 = pneg %p82
        %p207 = pneg %p79
        %p208 = pneg %p103
        %p209 = pneg %p100
        %p210 = pneg %p124
        %p211 = pneg %p121
        %p212 = pneg %p150
        %p213 = pneg %p147
        %s214 = sand.u32 %s137, 1
        %s215 = scalar_lea.sflag [#allocation3], %s214
        %s216 = sand.u32 %s137, 1
        %s217 = smul.addr %s216, 112
        %s218 = scalar_lea.vmem [#allocation2], %s217
        %s219 = smul.u32 2, %s19
        %p220 = scmp.lt.s32.totalorder %s219, 3
        %s221 = scalar_select %p220, %s219, 3
        %s222 = smul.addr %s221, 8
        %s223 = scalar_lea.vmem %s0, %s222
        %s224 = smul.u32 2, %s19
        %s225 = smul.u32 2, %s19
        %v227 = vld [vmem:[%s223] sm:$0xff]
        %v228 = vld [vmem:[%s223 + $0x8] sm:$0xff]
        %v229 = vpack.c.bf16 %v228, %v227
        %v230 = vld [vmem:[%s1] sm:$0xff]
        %v231 = vld [vmem:[%s1 + $0x8] sm:$0xff]
        %v232 = vld [vmem:[%s1 + $0x10] sm:$0xff]
        %v233 = vld [vmem:[%s1 + $0x18] sm:$0xff]
        %v234 = vld [vmem:[%s1 + $0x20] sm:$0xff]
        %v235 = vld [vmem:[%s1 + $0x28] sm:$0xff]
        %v236 = vld [vmem:[%s1 + $0x30] sm:$0xff]
        %v237 = vld [vmem:[%s1 + $0x38] sm:$0xff]
        %v238 = vld [vmem:[%s1 + $0x40] sm:$0xff]
        %v239 = vld [vmem:[%s1 + $0x48] sm:$0xff]
        %v240 = vld [vmem:[%s1 + $0x50] sm:$0xff]
        %v241 = vld [vmem:[%s1 + $0x58] sm:$0xff]
        %v242 = vld [vmem:[%s1 + $0x60] sm:$0xff]
        %v243 = vld [vmem:[%s1 + $0x68] sm:$0xff]
        %v244 = vld [vmem:[%s1 + $0x70] sm:$0xff]
        %v245 = vld [vmem:[%s1 + $0x78] sm:$0xff]
        %v246 = vpack.c.bf16 %v232, %v230
        %v247 = vpack.c.bf16 %v233, %v231
        %v248 = vpack.c.bf16 %v236, %v234
        %v249 = vpack.c.bf16 %v237, %v235
        %v250 = vpack.c.bf16 %v240, %v238
        %v251 = vpack.c.bf16 %v241, %v239
        %v252 = vpack.c.bf16 %v244, %v242
        %v253 = vpack.c.bf16 %v245, %v243
        %v254 = vld [vmem:[%s2] sm:$0x3]
        %v256 = vlaneseq
        %v257 = vshrl.u32 %v256, 7
        %v258 = vsub.s32 0, %v257
        %v259 = vrot.slane %v254, %v258
        %v260 = vlaneseq
        %v261 = vshrl.u32 %v260, 7
        %v262 = vsub.s32 1, %v261
        %v263 = vrot.slane %v254, %v262
        %vm266 = vcmask 523264
        %v268 = vsel %vm266, %v229, 0
        %270 = vmatprep.subr.bf16.mxu0 0
        %271 = vmatpush1.bf16.msra.mxu0 0
        %272 = vmatprep.subr.bf16.mxu0 0
        %273 = vmatpush1.bf16.msra.mxu0 0
        %274 = vmatprep.subr.bf16.mxu0 0
        %275 = vmatpush1.bf16.msra.mxu0 0
        %276 = vmatprep.subr.bf16.mxu0 0
        %277 = vmatpush1.bf16.msra.mxu0 0
        %278 = vmatprep.subr.bf16.mxu0 %v253
        %279 = vmatpush1.bf16.msra.mxu0 %v252
        %280 = vmatprep.subr.bf16.mxu0 %v251
        %281 = vmatpush1.bf16.msra.mxu0 %v250
        %282 = vmatprep.subr.bf16.mxu0 %v249
        %283 = vmatpush1.bf16.msra.mxu0 %v248
        %284 = vmatprep.subr.bf16.mxu0 %v247
        %285 = vmatpush1.bf16.msra.mxu0 %v246
        %286 = vmatprep.subr.bf16.mxu0 0
        %287 = vmatpush2.bf16.msra.mxu0 0
        %288 = vmatprep.subr.bf16.mxu0 0
        %289 = vmatpush2.bf16.msra.mxu0 0
        %290 = vmatprep.subr.bf16.mxu0 0
        %291 = vmatpush2.bf16.msra.mxu0 0
        %292 = vmatprep.subr.bf16.mxu0 0
        %293 = vmatpush2.bf16.msra.mxu0 0
        %294 = vmatprep.subr.bf16.mxu0 0
        %295 = vmatpush2.bf16.msra.mxu0 0
        %296 = vmatprep.subr.bf16.mxu0 0
        %297 = vmatpush2.bf16.msra.mxu0 0
        %298 = vmatprep.subr.bf16.mxu0 0
        %299 = vmatpush2.bf16.msra.mxu0 0
        %300 = vmatprep.subr.bf16.mxu0 0
        %301 = vmatpush2.bf16.msra.mxu0 0
        %302 = vmatprep.mubr.bf16.mxu0 0
        %303 = vmatmul.mubr.bf16.gmra.mxu0 %v268
        %v304 = vpop.f32.mrf.mxu0
        %v305 = vadd.f32 %v259, %v304
        %v306 = vpop.f32.mrf.mxu0
        %v307 = vadd.f32 %v263, %v306
        %v308 = vpop.f32.mrf.mxu0
        %v309 = vadd.f32 %v259, %v308
        %v310 = vpop.f32.mrf.mxu0
        %v311 = vadd.f32 %v263, %v310
        %312 = vdwg.mxu0
        %vm313 = vcmp.ge.f32.partialorder %v305, 0.0
        %vm314 = vcmp.ge.f32.partialorder %v307, 0.0
        %vm315 = vcmp.ge.f32.partialorder %v309, 0.0
        %vm316 = vcmp.ge.f32.partialorder %v311, 0.0
        %v317 = vmul.f32 %v305, 0.1
        %v318 = vmul.f32 %v307, 0.1
        %v319 = vmul.f32 %v309, 0.1
        %v320 = vmul.f32 %v311, 0.1
        %v321 = vsel %vm313, %v305, %v317
        %v322 = vsel %vm314, %v307, %v318
        %v323 = vsel %vm315, %v309, %v319
        %v324 = vsel %vm316, %v311, %v320
        %v325 = vld [vmem:[%s3] sm:$0xff]
        %v326 = vld [vmem:[%s3 + $0x8] sm:$0xff]
        %v327 = vld [vmem:[%s3 + $0x10] sm:$0xff]
        %v328 = vld [vmem:[%s3 + $0x18] sm:$0xff]
        %v329 = vld [vmem:[%s3 + $0x20] sm:$0xff]
        %v330 = vld [vmem:[%s3 + $0x28] sm:$0xff]
        %v331 = vld [vmem:[%s3 + $0x30] sm:$0xff]
        %v332 = vld [vmem:[%s3 + $0x38] sm:$0xff]
        %v333 = vld [vmem:[%s3 + $0x40] sm:$0xff]
        %v334 = vld [vmem:[%s3 + $0x48] sm:$0xff]
        %v335 = vld [vmem:[%s3 + $0x50] sm:$0xff]
        %v336 = vld [vmem:[%s3 + $0x58] sm:$0xff]
        %v337 = vld [vmem:[%s3 + $0x60] sm:$0xff]
        %v338 = vld [vmem:[%s3 + $0x68] sm:$0xff]
        %v339 = vld [vmem:[%s3 + $0x70] sm:$0xff]
        %v340 = vld [vmem:[%s3 + $0x78] sm:$0xff]
        %v341 = vld [vmem:[%s3 + $0x80] sm:$0xff]
        %v342 = vld [vmem:[%s3 + $0x88] sm:$0xff]
        %v343 = vld [vmem:[%s3 + $0x90] sm:$0xff]
        %v344 = vld [vmem:[%s3 + $0x98] sm:$0xff]
        %v345 = vld [vmem:[%s3 + $0xa0] sm:$0xff]
        %v346 = vld [vmem:[%s3 + $0xa8] sm:$0xff]
        %v347 = vld [vmem:[%s3 + $0xb0] sm:$0xff]
        %v348 = vld [vmem:[%s3 + $0xb8] sm:$0xff]
        %v349 = vld [vmem:[%s3 + $0xc0] sm:$0xff]
        %v350 = vld [vmem:[%s3 + $0xc8] sm:$0xff]
        %v351 = vld [vmem:[%s3 + $0xd0] sm:$0xff]
        %v352 = vld [vmem:[%s3 + $0xd8] sm:$0xff]
        %v353 = vld [vmem:[%s3 + $0xe0] sm:$0xff]
        %v354 = vld [vmem:[%s3 + $0xe8] sm:$0xff]
        %v355 = vld [vmem:[%s3 + $0xf0] sm:$0xff]
        %v356 = vld [vmem:[%s3 + $0xf8] sm:$0xff]
        %v357 = vld [vmem:[%s3 + $0x100] sm:$0xff]
        %v358 = vld [vmem:[%s3 + $0x108] sm:$0xff]
        %v359 = vld [vmem:[%s3 + $0x110] sm:$0xff]
        %v360 = vld [vmem:[%s3 + $0x118] sm:$0xff]
        %v361 = vld [vmem:[%s3 + $0x120] sm:$0xff]
        %v362 = vld [vmem:[%s3 + $0x128] sm:$0xff]
        %v363 = vld [vmem:[%s3 + $0x130] sm:$0xff]
        %v364 = vld [vmem:[%s3 + $0x138] sm:$0xff]
        %v365 = vld [vmem:[%s3 + $0x140] sm:$0xff]
        %v366 = vld [vmem:[%s3 + $0x148] sm:$0xff]
        %v367 = vld [vmem:[%s3 + $0x150] sm:$0xff]
        %v368 = vld [vmem:[%s3 + $0x158] sm:$0xff]
        %v369 = vld [vmem:[%s3 + $0x160] sm:$0xff]
        %v370 = vld [vmem:[%s3 + $0x168] sm:$0xff]
        %v371 = vld [vmem:[%s3 + $0x170] sm:$0xff]
        %v372 = vld [vmem:[%s3 + $0x178] sm:$0xff]
        %v373 = vld [vmem:[%s3 + $0x180] sm:$0xff]
        %v374 = vld [vmem:[%s3 + $0x188] sm:$0xff]
        %v375 = vld [vmem:[%s3 + $0x190] sm:$0xff]
        %v376 = vld [vmem:[%s3 + $0x198] sm:$0xff]
        %v377 = vld [vmem:[%s3 + $0x1a0] sm:$0xff]
        %v378 = vld [vmem:[%s3 + $0x1a8] sm:$0xff]
        %v379 = vld [vmem:[%s3 + $0x1b0] sm:$0xff]
        %v380 = vld [vmem:[%s3 + $0x1b8] sm:$0xff]
        %v381 = vld [vmem:[%s3 + $0x1c0] sm:$0xff]
        %v382 = vld [vmem:[%s3 + $0x1c8] sm:$0xff]
        %v383 = vld [vmem:[%s3 + $0x1d0] sm:$0xff]
        %v384 = vld [vmem:[%s3 + $0x1d8] sm:$0xff]
        %v385 = vld [vmem:[%s3 + $0x1e0] sm:$0xff]
        %v386 = vld [vmem:[%s3 + $0x1e8] sm:$0xff]
        %v387 = vld [vmem:[%s3 + $0x1f0] sm:$0xff]
        %v388 = vld [vmem:[%s3 + $0x1f8] sm:$0xff]
        %v389 = vld [vmem:[%s3 + $0x200] sm:$0xff]
        %v390 = vld [vmem:[%s3 + $0x208] sm:$0xff]
        %v391 = vld [vmem:[%s3 + $0x210] sm:$0xff]
        %v392 = vld [vmem:[%s3 + $0x218] sm:$0xff]
        %v393 = vld [vmem:[%s3 + $0x220] sm:$0xff]
        %v394 = vld [vmem:[%s3 + $0x228] sm:$0xff]
        %v395 = vld [vmem:[%s3 + $0x230] sm:$0xff]
        %v396 = vld [vmem:[%s3 + $0x238] sm:$0xff]
        %v397 = vld [vmem:[%s3 + $0x240] sm:$0xff]
        %v398 = vld [vmem:[%s3 + $0x248] sm:$0xff]
        %v399 = vld [vmem:[%s3 + $0x250] sm:$0xff]
        %v400 = vld [vmem:[%s3 + $0x258] sm:$0xff]
        %v401 = vld [vmem:[%s3 + $0x260] sm:$0xff]
        %v402 = vld [vmem:[%s3 + $0x268] sm:$0xff]
        %v403 = vld [vmem:[%s3 + $0x270] sm:$0xff]
        %v404 = vld [vmem:[%s3 + $0x278] sm:$0xff]
        %v405 = vld [vmem:[%s3 + $0x280] sm:$0xff]
        %v406 = vld [vmem:[%s3 + $0x288] sm:$0xff]
        %v407 = vld [vmem:[%s3 + $0x290] sm:$0xff]
        %v408 = vld [vmem:[%s3 + $0x298] sm:$0xff]
        %v409 = vld [vmem:[%s3 + $0x2a0] sm:$0xff]
        %v410 = vld [vmem:[%s3 + $0x2a8] sm:$0xff]
        %v411 = vld [vmem:[%s3 + $0x2b0] sm:$0xff]
        %v412 = vld [vmem:[%s3 + $0x2b8] sm:$0xff]
        %v413 = vld [vmem:[%s3 + $0x2c0] sm:$0xff]
        %v414 = vld [vmem:[%s3 + $0x2c8] sm:$0xff]
        %v415 = vld [vmem:[%s3 + $0x2d0] sm:$0xff]
        %v416 = vld [vmem:[%s3 + $0x2d8] sm:$0xff]
        %v417 = vld [vmem:[%s3 + $0x2e0] sm:$0xff]
        %v418 = vld [vmem:[%s3 + $0x2e8] sm:$0xff]
        %v419 = vld [vmem:[%s3 + $0x2f0] sm:$0xff]
        %v420 = vld [vmem:[%s3 + $0x2f8] sm:$0xff]
        %v421 = vld [vmem:[%s3 + $0x300] sm:$0xff]
        %v422 = vld [vmem:[%s3 + $0x308] sm:$0xff]
        %v423 = vld [vmem:[%s3 + $0x310] sm:$0xff]
        %v424 = vld [vmem:[%s3 + $0x318] sm:$0xff]
        %v425 = vld [vmem:[%s3 + $0x320] sm:$0xff]
        %v426 = vld [vmem:[%s3 + $0x328] sm:$0xff]
        %v427 = vld [vmem:[%s3 + $0x330] sm:$0xff]
        %v428 = vld [vmem:[%s3 + $0x338] sm:$0xff]
        %v429 = vld [vmem:[%s3 + $0x340] sm:$0xff]
        %v430 = vld [vmem:[%s3 + $0x348] sm:$0xff]
        %v431 = vld [vmem:[%s3 + $0x350] sm:$0xff]
        %v432 = vld [vmem:[%s3 + $0x358] sm:$0xff]
        %v433 = vld [vmem:[%s3 + $0x360] sm:$0xff]
        %v434 = vld [vmem:[%s3 + $0x368] sm:$0xff]
        %v435 = vld [vmem:[%s3 + $0x370] sm:$0xff]
        %v436 = vld [vmem:[%s3 + $0x378] sm:$0xff]
        %v437 = vld [vmem:[%s3 + $0x380] sm:$0xff]
        %v438 = vld [vmem:[%s3 + $0x388] sm:$0xff]
        %v439 = vld [vmem:[%s3 + $0x390] sm:$0xff]
        %v440 = vld [vmem:[%s3 + $0x398] sm:$0xff]
        %v441 = vld [vmem:[%s3 + $0x3a0] sm:$0xff]
        %v442 = vld [vmem:[%s3 + $0x3a8] sm:$0xff]
        %v443 = vld [vmem:[%s3 + $0x3b0] sm:$0xff]
        %v444 = vld [vmem:[%s3 + $0x3b8] sm:$0xff]
        %v445 = vld [vmem:[%s3 + $0x3c0] sm:$0xff]
        %v446 = vld [vmem:[%s3 + $0x3c8] sm:$0xff]
        %v447 = vld [vmem:[%s3 + $0x3d0] sm:$0xff]
        %v448 = vld [vmem:[%s3 + $0x3d8] sm:$0xff]
        %v449 = vld [vmem:[%s3 + $0x3e0] sm:$0xff]
        %v450 = vld [vmem:[%s3 + $0x3e8] sm:$0xff]
        %v451 = vld [vmem:[%s3 + $0x3f0] sm:$0xff]
        %v452 = vld [vmem:[%s3 + $0x3f8] sm:$0xff]
        %v453 = vld [vmem:[%s3 + $0x400] sm:$0xff]
        %v454 = vld [vmem:[%s3 + $0x408] sm:$0xff]
        %v455 = vld [vmem:[%s3 + $0x410] sm:$0xff]
        %v456 = vld [vmem:[%s3 + $0x418] sm:$0xff]
        %v457 = vld [vmem:[%s3 + $0x420] sm:$0xff]
        %v458 = vld [vmem:[%s3 + $0x428] sm:$0xff]
        %v459 = vld [vmem:[%s3 + $0x430] sm:$0xff]
        %v460 = vld [vmem:[%s3 + $0x438] sm:$0xff]
        %v461 = vld [vmem:[%s3 + $0x440] sm:$0xff]
        %v462 = vld [vmem:[%s3 + $0x448] sm:$0xff]
        %v463 = vld [vmem:[%s3 + $0x450] sm:$0xff]
        %v464 = vld [vmem:[%s3 + $0x458] sm:$0xff]
        %v465 = vld [vmem:[%s3 + $0x460] sm:$0xff]
        %v466 = vld [vmem:[%s3 + $0x468] sm:$0xff]
        %v467 = vld [vmem:[%s3 + $0x470] sm:$0xff]
        %v468 = vld [vmem:[%s3 + $0x478] sm:$0xff]
        %v469 = vld [vmem:[%s3 + $0x480] sm:$0xff]
        %v470 = vld [vmem:[%s3 + $0x488] sm:$0xff]
        %v471 = vld [vmem:[%s3 + $0x490] sm:$0xff]
        %v472 = vld [vmem:[%s3 + $0x498] sm:$0xff]
        %v473 = vld [vmem:[%s3 + $0x4a0] sm:$0xff]
        %v474 = vld [vmem:[%s3 + $0x4a8] sm:$0xff]
        %v475 = vld [vmem:[%s3 + $0x4b0] sm:$0xff]
        %v476 = vld [vmem:[%s3 + $0x4b8] sm:$0xff]
        %v477 = vld [vmem:[%s3 + $0x4c0] sm:$0xff]
        %v478 = vld [vmem:[%s3 + $0x4c8] sm:$0xff]
        %v479 = vld [vmem:[%s3 + $0x4d0] sm:$0xff]
        %v480 = vld [vmem:[%s3 + $0x4d8] sm:$0xff]
        %v481 = vld [vmem:[%s3 + $0x4e0] sm:$0xff]
        %v482 = vld [vmem:[%s3 + $0x4e8] sm:$0xff]
        %v483 = vld [vmem:[%s3 + $0x4f0] sm:$0xff]
        %v484 = vld [vmem:[%s3 + $0x4f8] sm:$0xff]
        %v485 = vld [vmem:[%s3 + $0x500] sm:$0xff]
        %v486 = vld [vmem:[%s3 + $0x508] sm:$0xff]
        %v487 = vld [vmem:[%s3 + $0x510] sm:$0xff]
        %v488 = vld [vmem:[%s3 + $0x518] sm:$0xff]
        %v489 = vld [vmem:[%s3 + $0x520] sm:$0xff]
        %v490 = vld [vmem:[%s3 + $0x528] sm:$0xff]
        %v491 = vld [vmem:[%s3 + $0x530] sm:$0xff]
        %v492 = vld [vmem:[%s3 + $0x538] sm:$0xff]
        %v493 = vld [vmem:[%s3 + $0x540] sm:$0xff]
        %v494 = vld [vmem:[%s3 + $0x548] sm:$0xff]
        %v495 = vld [vmem:[%s3 + $0x550] sm:$0xff]
        %v496 = vld [vmem:[%s3 + $0x558] sm:$0xff]
        %v497 = vld [vmem:[%s3 + $0x560] sm:$0xff]
        %v498 = vld [vmem:[%s3 + $0x568] sm:$0xff]
        %v499 = vld [vmem:[%s3 + $0x570] sm:$0xff]
        %v500 = vld [vmem:[%s3 + $0x578] sm:$0xff]
        %v501 = vld [vmem:[%s3 + $0x580] sm:$0xff]
        %v502 = vld [vmem:[%s3 + $0x588] sm:$0xff]
        %v503 = vld [vmem:[%s3 + $0x590] sm:$0xff]
        %v504 = vld [vmem:[%s3 + $0x598] sm:$0xff]
        %v505 = vld [vmem:[%s3 + $0x5a0] sm:$0xff]
        %v506 = vld [vmem:[%s3 + $0x5a8] sm:$0xff]
        %v507 = vld [vmem:[%s3 + $0x5b0] sm:$0xff]
        %v508 = vld [vmem:[%s3 + $0x5b8] sm:$0xff]
        %v509 = vld [vmem:[%s3 + $0x5c0] sm:$0xff]
        %v510 = vld [vmem:[%s3 + $0x5c8] sm:$0xff]
        %v511 = vld [vmem:[%s3 + $0x5d0] sm:$0xff]
        %v512 = vld [vmem:[%s3 + $0x5d8] sm:$0xff]
        %v513 = vld [vmem:[%s3 + $0x5e0] sm:$0xff]
        %v514 = vld [vmem:[%s3 + $0x5e8] sm:$0xff]
        %v515 = vld [vmem:[%s3 + $0x5f0] sm:$0xff]
        %v516 = vld [vmem:[%s3 + $0x5f8] sm:$0xff]
        %v517 = vld [vmem:[%s3 + $0x600] sm:$0xff]
        %v518 = vld [vmem:[%s3 + $0x608] sm:$0xff]
        %v519 = vld [vmem:[%s3 + $0x610] sm:$0xff]
        %v520 = vld [vmem:[%s3 + $0x618] sm:$0xff]
        %v521 = vld [vmem:[%s3 + $0x620] sm:$0xff]
        %v522 = vld [vmem:[%s3 + $0x628] sm:$0xff]
        %v523 = vld [vmem:[%s3 + $0x630] sm:$0xff]
        %v524 = vld [vmem:[%s3 + $0x638] sm:$0xff]
        %v525 = vld [vmem:[%s3 + $0x640] sm:$0xff]
        %v526 = vld [vmem:[%s3 + $0x648] sm:$0xff]
        %v527 = vld [vmem:[%s3 + $0x650] sm:$0xff]
        %v528 = vld [vmem:[%s3 + $0x658] sm:$0xff]
        %v529 = vld [vmem:[%s3 + $0x660] sm:$0xff]
        %v530 = vld [vmem:[%s3 + $0x668] sm:$0xff]
        %v531 = vld [vmem:[%s3 + $0x670] sm:$0xff]
        %v532 = vld [vmem:[%s3 + $0x678] sm:$0xff]
        %v533 = vld [vmem:[%s3 + $0x680] sm:$0xff]
        %v534 = vld [vmem:[%s3 + $0x688] sm:$0xff]
        %v535 = vld [vmem:[%s3 + $0x690] sm:$0xff]
        %v536 = vld [vmem:[%s3 + $0x698] sm:$0xff]
        %v537 = vld [vmem:[%s3 + $0x6a0] sm:$0xff]
        %v538 = vld [vmem:[%s3 + $0x6a8] sm:$0xff]
        %v539 = vld [vmem:[%s3 + $0x6b0] sm:$0xff]
        %v540 = vld [vmem:[%s3 + $0x6b8] sm:$0xff]
        %v541 = vld [vmem:[%s3 + $0x6c0] sm:$0xff]
        %v542 = vld [vmem:[%s3 + $0x6c8] sm:$0xff]
        %v543 = vld [vmem:[%s3 + $0x6d0] sm:$0xff]
        %v544 = vld [vmem:[%s3 + $0x6d8] sm:$0xff]
        %v545 = vld [vmem:[%s3 + $0x6e0] sm:$0xff]
        %v546 = vld [vmem:[%s3 + $0x6e8] sm:$0xff]
        %v547 = vld [vmem:[%s3 + $0x6f0] sm:$0xff]
        %v548 = vld [vmem:[%s3 + $0x6f8] sm:$0xff]
        %v549 = vpack.c.bf16 %v332, %v325
        %v550 = vpack.c.bf16 %v333, %v326
        %v551 = vpack.c.bf16 %v334, %v327
        %v552 = vpack.c.bf16 %v335, %v328
        %v553 = vpack.c.bf16 %v336, %v329
        %v554 = vpack.c.bf16 %v337, %v330
        %v555 = vpack.c.bf16 %v338, %v331
        %v556 = vpack.c.bf16 %v346, %v339
        %v557 = vpack.c.bf16 %v347, %v340
        %v558 = vpack.c.bf16 %v348, %v341
        %v559 = vpack.c.bf16 %v349, %v342
        %v560 = vpack.c.bf16 %v350, %v343
        %v561 = vpack.c.bf16 %v351, %v344
        %v562 = vpack.c.bf16 %v352, %v345
        %v563 = vpack.c.bf16 %v360, %v353
        %v564 = vpack.c.bf16 %v361, %v354
        %v565 = vpack.c.bf16 %v362, %v355
        %v566 = vpack.c.bf16 %v363, %v356
        %v567 = vpack.c.bf16 %v364, %v357
        %v568 = vpack.c.bf16 %v365, %v358
        %v569 = vpack.c.bf16 %v366, %v359
        %v570 = vpack.c.bf16 %v374, %v367
        %v571 = vpack.c.bf16 %v375, %v368
        %v572 = vpack.c.bf16 %v376, %v369
        %v573 = vpack.c.bf16 %v377, %v370
        %v574 = vpack.c.bf16 %v378, %v371
        %v575 = vpack.c.bf16 %v379, %v372
        %v576 = vpack.c.bf16 %v380, %v373
        %v577 = vpack.c.bf16 %v388, %v381
        %v578 = vpack.c.bf16 %v389, %v382
        %v579 = vpack.c.bf16 %v390, %v383
        %v580 = vpack.c.bf16 %v391, %v384
        %v581 = vpack.c.bf16 %v392, %v385
        %v582 = vpack.c.bf16 %v393, %v386
        %v583 = vpack.c.bf16 %v394, %v387
        %v584 = vpack.c.bf16 %v402, %v395
        %v585 = vpack.c.bf16 %v403, %v396
        %v586 = vpack.c.bf16 %v404, %v397
        %v587 = vpack.c.bf16 %v405, %v398
        %v588 = vpack.c.bf16 %v406, %v399
        %v589 = vpack.c.bf16 %v407, %v400
        %v590 = vpack.c.bf16 %v408, %v401
        %v591 = vpack.c.bf16 %v416, %v409
        %v592 = vpack.c.bf16 %v417, %v410
        %v593 = vpack.c.bf16 %v418, %v411
        %v594 = vpack.c.bf16 %v419, %v412
        %v595 = vpack.c.bf16 %v420, %v413
        %v596 = vpack.c.bf16 %v421, %v414
        %v597 = vpack.c.bf16 %v422, %v415
        %v598 = vpack.c.bf16 %v430, %v423
        %v599 = vpack.c.bf16 %v431, %v424
        %v600 = vpack.c.bf16 %v432, %v425
        %v601 = vpack.c.bf16 %v433, %v426
        %v602 = vpack.c.bf16 %v434, %v427
        %v603 = vpack.c.bf16 %v435, %v428
        %v604 = vpack.c.bf16 %v436, %v429
        %v605 = vpack.c.bf16 %v444, %v437
        %v606 = vpack.c.bf16 %v445, %v438
        %v607 = vpack.c.bf16 %v446, %v439
        %v608 = vpack.c.bf16 %v447, %v440
        %v609 = vpack.c.bf16 %v448, %v441
        %v610 = vpack.c.bf16 %v449, %v442
        %v611 = vpack.c.bf16 %v450, %v443
        %v612 = vpack.c.bf16 %v458, %v451
        %v613 = vpack.c.bf16 %v459, %v452
        %v614 = vpack.c.bf16 %v460, %v453
        %v615 = vpack.c.bf16 %v461, %v454
        %v616 = vpack.c.bf16 %v462, %v455
        %v617 = vpack.c.bf16 %v463, %v456
        %v618 = vpack.c.bf16 %v464, %v457
        %v619 = vpack.c.bf16 %v472, %v465
        %v620 = vpack.c.bf16 %v473, %v466
        %v621 = vpack.c.bf16 %v474, %v467
        %v622 = vpack.c.bf16 %v475, %v468
        %v623 = vpack.c.bf16 %v476, %v469
        %v624 = vpack.c.bf16 %v477, %v470
        %v625 = vpack.c.bf16 %v478, %v471
        %v626 = vpack.c.bf16 %v486, %v479
        %v627 = vpack.c.bf16 %v487, %v480
        %v628 = vpack.c.bf16 %v488, %v481
        %v629 = vpack.c.bf16 %v489, %v482
        %v630 = vpack.c.bf16 %v490, %v483
        %v631 = vpack.c.bf16 %v491, %v484
        %v632 = vpack.c.bf16 %v492, %v485
        %v633 = vpack.c.bf16 %v500, %v493
        %v634 = vpack.c.bf16 %v501, %v494
        %v635 = vpack.c.bf16 %v502, %v495
        %v636 = vpack.c.bf16 %v503, %v496
        %v637 = vpack.c.bf16 %v504, %v497
        %v638 = vpack.c.bf16 %v505, %v498
        %v639 = vpack.c.bf16 %v506, %v499
        %v640 = vpack.c.bf16 %v514, %v507
        %v641 = vpack.c.bf16 %v515, %v508
        %v642 = vpack.c.bf16 %v516, %v509
        %v643 = vpack.c.bf16 %v517, %v510
        %v644 = vpack.c.bf16 %v518, %v511
        %v645 = vpack.c.bf16 %v519, %v512
        %v646 = vpack.c.bf16 %v520, %v513
        %v647 = vpack.c.bf16 %v528, %v521
        %v648 = vpack.c.bf16 %v529, %v522
        %v649 = vpack.c.bf16 %v530, %v523
        %v650 = vpack.c.bf16 %v531, %v524
        %v651 = vpack.c.bf16 %v532, %v525
        %v652 = vpack.c.bf16 %v533, %v526
        %v653 = vpack.c.bf16 %v534, %v527
        %v654 = vpack.c.bf16 %v542, %v535
        %v655 = vpack.c.bf16 %v543, %v536
        %v656 = vpack.c.bf16 %v544, %v537
        %v657 = vpack.c.bf16 %v545, %v538
        %v658 = vpack.c.bf16 %v546, %v539
        %v659 = vpack.c.bf16 %v547, %v540
        %v660 = vpack.c.bf16 %v548, %v541
        %v661 = vpack.c.bf16 %v323, %v321
        %v662 = vpack.c.bf16 %v324, %v322
        %v663 = vld [vmem:[%s4] sm:$0x7f]
        %v665 = vlaneseq
        %v666 = vshrl.u32 %v665, 7
        %v667 = vsub.s32 0, %v666
        %v668 = vrot.slane %v663, %v667
        %v669 = vlaneseq
        %v670 = vshrl.u32 %v669, 7
        %v671 = vsub.s32 1, %v670
        %v672 = vrot.slane %v663, %v671
        %v673 = vlaneseq
        %v674 = vshrl.u32 %v673, 7
        %v675 = vsub.s32 2, %v674
        %v676 = vrot.slane %v663, %v675
        %v677 = vlaneseq
        %v678 = vshrl.u32 %v677, 7
        %v679 = vsub.s32 3, %v678
        %v680 = vrot.slane %v663, %v679
        %v681 = vlaneseq
        %v682 = vshrl.u32 %v681, 7
        %v683 = vsub.s32 4, %v682
        %v684 = vrot.slane %v663, %v683
        %v685 = vlaneseq
        %v686 = vshrl.u32 %v685, 7
        %v687 = vsub.s32 5, %v686
        %v688 = vrot.slane %v663, %v687
        %v689 = vlaneseq
        %v690 = vshrl.u32 %v689, 7
        %v691 = vsub.s32 6, %v690
        %v692 = vrot.slane %v663, %v691
        %700 = vmatprep.subr.bf16.mxu0 %v599
        %701 = vmatpush1.bf16.msra.mxu0 %v598
        %702 = vmatprep.subr.bf16.mxu0 %v592
        %703 = vmatpush1.bf16.msra.mxu0 %v591
        %704 = vmatprep.subr.bf16.mxu0 %v585
        %705 = vmatpush1.bf16.msra.mxu0 %v584
        %706 = vmatprep.subr.bf16.mxu0 %v578
        %707 = vmatpush1.bf16.msra.mxu0 %v577
        %708 = vmatprep.subr.bf16.mxu0 %v571
        %709 = vmatpush1.bf16.msra.mxu0 %v570
        %710 = vmatprep.subr.bf16.mxu0 %v564
        %711 = vmatpush1.bf16.msra.mxu0 %v563
        %712 = vmatprep.subr.bf16.mxu0 %v557
        %713 = vmatpush1.bf16.msra.mxu0 %v556
        %714 = vmatprep.subr.bf16.mxu0 %v550
        %715 = vmatpush1.bf16.msra.mxu0 %v549
        %716 = vmatprep.subr.bf16.mxu0 %v655
        %717 = vmatpush2.bf16.msra.mxu0 %v654
        %718 = vmatprep.subr.bf16.mxu0 %v648
        %719 = vmatpush2.bf16.msra.mxu0 %v647
        %720 = vmatprep.subr.bf16.mxu0 %v641
        %721 = vmatpush2.bf16.msra.mxu0 %v640
        %722 = vmatprep.subr.bf16.mxu0 %v634
        %723 = vmatpush2.bf16.msra.mxu0 %v633
        %724 = vmatprep.subr.bf16.mxu0 %v627
        %725 = vmatpush2.bf16.msra.mxu0 %v626
        %726 = vmatprep.subr.bf16.mxu0 %v620
        %727 = vmatpush2.bf16.msra.mxu0 %v619
        %728 = vmatprep.subr.bf16.mxu0 %v613
        %729 = vmatpush2.bf16.msra.mxu0 %v612
        %730 = vmatprep.subr.bf16.mxu0 %v606
        %731 = vmatpush2.bf16.msra.mxu0 %v605
        %732 = vmatprep.mubr.bf16.mxu0 %v662
        %733 = vmatmul.mubr.bf16.gmra.mxu0 %v661
        %v734 = vpop.f32.mrf.mxu0
        %v735 = vadd.f32 %v668, %v734
        %v736 = vpop.f32.mrf.mxu0
        %v737 = vadd.f32 %v672, %v736
        %v738 = vpop.f32.mrf.mxu0
        %v739 = vadd.f32 %v668, %v738
        %v740 = vpop.f32.mrf.mxu0
        %v741 = vadd.f32 %v672, %v740
        %742 = vdwg.mxu0
        %743 = vmatprep.subr.bf16.mxu0 %v601
        %744 = vmatpush1.bf16.msra.mxu0 %v600
        %745 = vmatprep.subr.bf16.mxu0 %v594
        %746 = vmatpush1.bf16.msra.mxu0 %v593
        %747 = vmatprep.subr.bf16.mxu0 %v587
        %748 = vmatpush1.bf16.msra.mxu0 %v586
        %749 = vmatprep.subr.bf16.mxu0 %v580
        %750 = vmatpush1.bf16.msra.mxu0 %v579
        %751 = vmatprep.subr.bf16.mxu0 %v573
        %752 = vmatpush1.bf16.msra.mxu0 %v572
        %753 = vmatprep.subr.bf16.mxu0 %v566
        %754 = vmatpush1.bf16.msra.mxu0 %v565
        %755 = vmatprep.subr.bf16.mxu0 %v559
        %756 = vmatpush1.bf16.msra.mxu0 %v558
        %757 = vmatprep.subr.bf16.mxu0 %v552
        %758 = vmatpush1.bf16.msra.mxu0 %v551
        %759 = vmatprep.subr.bf16.mxu0 %v657
        %760 = vmatpush2.bf16.msra.mxu0 %v656
        %761 = vmatprep.subr.bf16.mxu0 %v650
        %762 = vmatpush2.bf16.msra.mxu0 %v649
        %763 = vmatprep.subr.bf16.mxu0 %v643
        %764 = vmatpush2.bf16.msra.mxu0 %v642
        %765 = vmatprep.subr.bf16.mxu0 %v636
        %766 = vmatpush2.bf16.msra.mxu0 %v635
        %767 = vmatprep.subr.bf16.mxu0 %v629
        %768 = vmatpush2.bf16.msra.mxu0 %v628
        %769 = vmatprep.subr.bf16.mxu0 %v622
        %770 = vmatpush2.bf16.msra.mxu0 %v621
        %771 = vmatprep.subr.bf16.mxu0 %v615
        %772 = vmatpush2.bf16.msra.mxu0 %v614
        %773 = vmatprep.subr.bf16.mxu0 %v608
        %774 = vmatpush2.bf16.msra.mxu0 %v607
        %775 = vmatprep.mubr.bf16.mxu0 %v662
        %776 = vmatmul.mubr.bf16.gmra.mxu0 %v661
        %v777 = vpop.f32.mrf.mxu0
        %v778 = vadd.f32 %v676, %v777
        %v779 = vpop.f32.mrf.mxu0
        %v780 = vadd.f32 %v680, %v779
        %v781 = vpop.f32.mrf.mxu0
        %v782 = vadd.f32 %v676, %v781
        %v783 = vpop.f32.mrf.mxu0
        %v784 = vadd.f32 %v680, %v783
        %785 = vdwg.mxu0
        %786 = vmatprep.subr.bf16.mxu0 %v603
        %787 = vmatpush1.bf16.msra.mxu0 %v602
        %788 = vmatprep.subr.bf16.mxu0 %v596
        %789 = vmatpush1.bf16.msra.mxu0 %v595
        %790 = vmatprep.subr.bf16.mxu0 %v589
        %791 = vmatpush1.bf16.msra.mxu0 %v588
        %792 = vmatprep.subr.bf16.mxu0 %v582
        %793 = vmatpush1.bf16.msra.mxu0 %v581
        %794 = vmatprep.subr.bf16.mxu0 %v575
        %795 = vmatpush1.bf16.msra.mxu0 %v574
        %796 = vmatprep.subr.bf16.mxu0 %v568
        %797 = vmatpush1.bf16.msra.mxu0 %v567
        %798 = vmatprep.subr.bf16.mxu0 %v561
        %799 = vmatpush1.bf16.msra.mxu0 %v560
        %800 = vmatprep.subr.bf16.mxu0 %v554
        %801 = vmatpush1.bf16.msra.mxu0 %v553
        %802 = vmatprep.subr.bf16.mxu0 %v659
        %803 = vmatpush2.bf16.msra.mxu0 %v658
        %804 = vmatprep.subr.bf16.mxu0 %v652
        %805 = vmatpush2.bf16.msra.mxu0 %v651
        %806 = vmatprep.subr.bf16.mxu0 %v645
        %807 = vmatpush2.bf16.msra.mxu0 %v644
        %808 = vmatprep.subr.bf16.mxu0 %v638
        %809 = vmatpush2.bf16.msra.mxu0 %v637
        %810 = vmatprep.subr.bf16.mxu0 %v631
        %811 = vmatpush2.bf16.msra.mxu0 %v630
        %812 = vmatprep.subr.bf16.mxu0 %v624
        %813 = vmatpush2.bf16.msra.mxu0 %v623
        %814 = vmatprep.subr.bf16.mxu0 %v617
        %815 = vmatpush2.bf16.msra.mxu0 %v616
        %816 = vmatprep.subr.bf16.mxu0 %v610
        %817 = vmatpush2.bf16.msra.mxu0 %v609
        %818 = vmatprep.mubr.bf16.mxu0 %v662
        %819 = vmatmul.mubr.bf16.gmra.mxu0 %v661
        %v820 = vpop.f32.mrf.mxu0
        %v821 = vadd.f32 %v684, %v820
        %v822 = vpop.f32.mrf.mxu0
        %v823 = vadd.f32 %v688, %v822
        %v824 = vpop.f32.mrf.mxu0
        %v825 = vadd.f32 %v684, %v824
        %v826 = vpop.f32.mrf.mxu0
        %v827 = vadd.f32 %v688, %v826
        %828 = vdwg.mxu0
        %829 = vmatprep.subr.bf16.mxu0 0
        %830 = vmatpush1.bf16.msra.mxu0 %v604
        %831 = vmatprep.subr.bf16.mxu0 0
        %832 = vmatpush1.bf16.msra.mxu0 %v597
        %833 = vmatprep.subr.bf16.mxu0 0
        %834 = vmatpush1.bf16.msra.mxu0 %v590
        %835 = vmatprep.subr.bf16.mxu0 0
        %836 = vmatpush1.bf16.msra.mxu0 %v583
        %837 = vmatprep.subr.bf16.mxu0 0
        %838 = vmatpush1.bf16.msra.mxu0 %v576
        %839 = vmatprep.subr.bf16.mxu0 0
        %840 = vmatpush1.bf16.msra.mxu0 %v569
        %841 = vmatprep.subr.bf16.mxu0 0
        %842 = vmatpush1.bf16.msra.mxu0 %v562
        %843 = vmatprep.subr.bf16.mxu0 0
        %844 = vmatpush1.bf16.msra.mxu0 %v555
        %845 = vmatprep.subr.bf16.mxu0 0
        %846 = vmatpush2.bf16.msra.mxu0 %v660
        %847 = vmatprep.subr.bf16.mxu0 0
        %848 = vmatpush2.bf16.msra.mxu0 %v653
        %849 = vmatprep.subr.bf16.mxu0 0
        %850 = vmatpush2.bf16.msra.mxu0 %v646
        %851 = vmatprep.subr.bf16.mxu0 0
        %852 = vmatpush2.bf16.msra.mxu0 %v639
        %853 = vmatprep.subr.bf16.mxu0 0
        %854 = vmatpush2.bf16.msra.mxu0 %v632
        %855 = vmatprep.subr.bf16.mxu0 0
        %856 = vmatpush2.bf16.msra.mxu0 %v625
        %857 = vmatprep.subr.bf16.mxu0 0
        %858 = vmatpush2.bf16.msra.mxu0 %v618
        %859 = vmatprep.subr.bf16.mxu0 0
        %860 = vmatpush2.bf16.msra.mxu0 %v611
        %861 = vmatprep.mubr.bf16.mxu0 %v662
        %862 = vmatmul.mubr.bf16.gmra.mxu0 %v661
        %v863 = vpop.f32.mrf.mxu0
        %v864 = vadd.f32 %v692, %v863
        %v865 = vpop.f32.mrf.mxu0
        %v866 = vpop.f32.mrf.mxu0
        %v867 = vadd.f32 %v692, %v866
        %v868 = vpop.f32.mrf.mxu0
        %869 = vdwg.mxu0
        %v870 = vtanh.pop %v735
        %v871 = vtanh.pop %v737
        %v872 = vtanh.pop %v778
        %v873 = vtanh.pop %v780
        %v874 = vtanh.pop %v821
        %v875 = vtanh.pop %v823
        %v876 = vtanh.pop %v864
        %v877 = vtanh.pop %v739
        %v878 = vtanh.pop %v741
        %v879 = vtanh.pop %v782
        %v880 = vtanh.pop %v784
        %v881 = vtanh.pop %v825
        %v882 = vtanh.pop %v827
        %v883 = vtanh.pop %v867
        %884 = vst [vmem:[%s218] sm:$0xff] %v870
        %885 = vst [vmem:[%s218 + $0x8] sm:$0xff] %v871
        %886 = vst [vmem:[%s218 + $0x10] sm:$0xff] %v872
        %887 = vst [vmem:[%s218 + $0x18] sm:$0xff] %v873
        %888 = vst [vmem:[%s218 + $0x20] sm:$0xff] %v874
        %889 = vst [vmem:[%s218 + $0x28] sm:$0xff] %v875
        %vm890 = vcmask 130048
        %891 = vst.msk [vmem:[%s218 + $0x30] sm:$0xff] %vm890, %v876
        %892 = vst [vmem:[%s218 + $0x38] sm:$0xff] %v877
        %893 = vst [vmem:[%s218 + $0x40] sm:$0xff] %v878
        %894 = vst [vmem:[%s218 + $0x48] sm:$0xff] %v879
        %895 = vst [vmem:[%s218 + $0x50] sm:$0xff] %v880
        %896 = vst [vmem:[%s218 + $0x58] sm:$0xff] %v881
        %897 = vst [vmem:[%s218 + $0x60] sm:$0xff] %v882
        %898 = vst.msk [vmem:[%s218 + $0x68] sm:$0xff] %vm890, %v883
        %s899 = sand.u32 %s137, 1
        %s900 = scalar_lea.sflag [#allocation3], %s899
        %s901 = sand.u32 %s137, 1
        %s902 = smul.addr %s901, 112
        %s903 = scalar_lea.vmem [#allocation2], %s902
        // Predicated region
        $region41: #{generator_forward.1} parent=39 // pred_check
          %p904 = pneg %p147
        $region42: #{generator_forward.1} parent=39 // pred_check_branch
          %906 = sbr.rel (%p904) target = $region44
        $region43: #{generator_forward.1} parent=39 // pred_region
          %s907 = smul.u32 2, %s19
          %s909 = ssub.s32 1792, 1792
          %910 = vsyncadd %s900, %s909
          %s911 = smul.addr %s907, 7
          %s912 = smul.addr %s911, 128
          %s913 = scalar_lea.hbm %s5, %s912
          %s914 = sshll.u32 %s903, 4
          %s915 = int_to_ptr.vmem [resolvable:$true] %s914
          %920 = dma.vmem_to_hbm [thread:$0]  %s915, 1792, %s913, %s900, 896, 896, 56
        $region44: #{generator_forward.1} parent=39 // pred_fallthru
          _
      $region40: #{generator_forward.1} parent=5 // pred_fallthru
        _
      %p921 = scmp.le.s32.totalorder 2, %s14
      // Predicated region
      $region45: #{generator_forward.1} parent=5 // pred_check
        %p922 = pneg %p921
      $region46: #{generator_forward.1} parent=5 // pred_check_branch
        %924 = sbr.rel (%p922) target = $region48
      $region47: #{generator_forward.1} parent=5 // pred_region
        %s925 = ssub.s32 %s14, 2
        // Predicated region
        $region49: #{generator_forward.1} parent=47 // pred_check
          %p926 = pneg %p153
        $region50: #{generator_forward.1} parent=47 // pred_check_branch
          %928 = sbr.rel (%p926) target = $region52
        $region51: #{generator_forward.1} parent=47 // pred_region
          %s929 = sand.u32 %s138, 1
          %s930 = scalar_lea.sflag [#allocation3], %s929
          %s931 = sand.u32 %s138, 1
          %s932 = smul.addr %s931, 112
          %s933 = scalar_lea.vmem [#allocation2], %s932
          %934 = dma.done %s930, 1792
        $region52: #{generator_forward.1} parent=47 // pred_fallthru
          _
      $region48: #{generator_forward.1} parent=5 // pred_fallthru
        _
    $region6: #{generator_forward.1} parent=1 // loop_footer
      %s18 = sadd.s32 1, %s14
    $region7: #{generator_forward.1} parent=1 // loop_footer_branch
      %13 = sbr.rel target = $region3
    $region8: #{generator_forward.1} parent=1 // loop_exit
      _
    %935 = vsyncpa [#allocation3], 1
    %s936 = scalar_lea.sflag [#allocation3], 1
    %937 = vsyncpa %s936, 1

</llo_original>
